<compile_context>
chip_gen: v6e
topology: v6e:2x2x1
jax: 0.10.0
libtpu: 0.0.40
codegen_flags: <defaults>
</compile_context>

<pallas_src>
import functools

import jax
import jax.numpy as jnp
from jax import lax
from jax.experimental import pallas as pl
from jax.experimental.pallas import tpu as pltpu


# ----------------------------- fused Pallas kernel -----------------------------

def _fused_resnet_block_kernel(p1_ref, w1_ref, b1_ref, wds_ref, w2_ref, b2d_ref,
                               o_ref, pad_ref, *, ho, wo, ci, co):
    """One image per grid step. Everything between the two HBM touches
    (conv1 patches in, final activation out) stays in VMEM / vregs."""
    m = ho * wo
    p1 = p1_ref[0]                                                   # (m, 9*Ci) bf16

    # conv1 (im2col matmul, BN1 scale folded into w1) + folded-BN shift + ReLU
    mid = jnp.dot(p1, w1_ref[...], preferred_element_type=jnp.float32)
    mid = jnp.maximum(mid + b1_ref[...], 0.0)                        # (m, Co) f32, VMEM resident

    # downsample identity: default 1x1 stride-s conv. Its input is exactly the centre
    # tap (dy=dx=1) of the conv1 im2col patches, so slice it out in-kernel (no extra DMA).
    xc = p1[:, 4 * ci:5 * ci]                                        # (m, Ci) bf16
    # conv2 accumulator starts with the residual identity + (bn2 shift + ds-BN shift)
    acc = jnp.dot(xc, wds_ref[...], preferred_element_type=jnp.float32) + b2d_ref[...]

    # conv2: zero-padded intermediate built in VMEM scratch; the 9 shifted 3x3 windows
    # are concatenated into one (m, 9*Co) patch matrix -> a single MXU matmul.
    pad_ref[...] = jnp.zeros_like(pad_ref)
    pad_ref[1:ho + 1, 1:wo + 1, :] = mid.reshape(ho, wo, co)
    wins = [pad_ref[dy:dy + ho, dx:dx + wo, :].reshape(m, co)
            for dy in range(3) for dx in range(3)]
    patches2 = jnp.concatenate(wins, axis=-1).astype(jnp.bfloat16)   # (m, 9*Co)
    acc = acc + jnp.dot(patches2, w2_ref[...], preferred_element_type=jnp.float32)

    o_ref[0] = jnp.maximum(acc, 0.0).astype(o_ref.dtype)


# --------------------------------- JAX glue -------------------------------------

def _im2col(x_nhwc, ksize, stride, padding):
    """(N, H, W, C) -> (N, Ho*Wo, k*k*C) with (dy, dx) outer / C inner ordering."""
    n, h, w, c = x_nhwc.shape
    xp = jnp.pad(x_nhwc, ((0, 0), (padding, padding), (padding, padding), (0, 0)))
    ho = (h + 2 * padding - ksize) // stride + 1
    wo = (w + 2 * padding - ksize) // stride + 1
    parts = [xp[:, dy:dy + stride * ho:stride, dx:dx + stride * wo:stride, :]
             for dy in range(ksize) for dx in range(ksize)]
    patches = jnp.concatenate(parts, axis=-1)                        # (N, Ho, Wo, k*k*C)
    return patches.reshape(n, ho * wo, ksize * ksize * c), (ho, wo)


def _weights_bn_folded(w_oihw, gamma, beta, mean, var, eps=1e-5):
    """PyTorch (Co, Ci, kh, kw) -> bf16 (kh*kw*Ci, Co) with BN scale folded in, + f32 shift."""
    scale = gamma / jnp.sqrt(var + eps)
    shift = beta - mean * scale
    co, ci, kh, kw = w_oihw.shape
    wmat = jnp.transpose(w_oihw, (2, 3, 1, 0)).reshape(kh * kw * ci, co)
    return (wmat * scale[None, :]).astype(jnp.bfloat16), shift.reshape(1, co).astype(jnp.float32)


@functools.partial(jax.jit, static_argnums=(2,))
def resnet_block_forward(x_nchw, params, stride):
    # TODO(synk): in a production NHWC pipeline, drop these boundary transposes entirely.
    x = jnp.transpose(x_nchw, (0, 2, 3, 1)).astype(jnp.bfloat16)     # NCHW -> NHWC, bf16
    n, h, w, ci = x.shape
    co = params["w1"].shape[0]

    # conv1 im2col (bf16, a few KB at these shapes).
    # TODO(synk): form conv1 patches in-kernel from a halo tile at production sizes.
    p1, (ho, wo) = _im2col(x, 3, stride, 1)                          # (N, M, 9*Ci)
    m = ho * wo

    w1m, b1 = _weights_bn_folded(params["w1"], *params["bn1"])
    w2m, b2 = _weights_bn_folded(params["w2"], *params["bn2"])
    wdm, bd = _weights_bn_folded(params["w_ds"], *params["bn_ds"])
    b2d = b2 + bd                                                    # fold the two post-conv2 shifts
    k1, k2 = w1m.shape[0], w2m.shape[0]

    flops = 2 * n * m * co * (k1 + ci + k2)
    bytes_accessed = (2 * (p1.size + w1m.size + w2m.size + wdm.size)
                      + 4 * (b1.size + b2d.size) + 4 * n * m * co)

    out = pl.pallas_call(
        functools.partial(_fused_resnet_block_kernel, ho=ho, wo=wo, ci=ci, co=co),
        out_shape=jax.ShapeDtypeStruct((n, m, co), jnp.float32),
        grid=(n,),
        in_specs=[
            pl.BlockSpec((1, m, k1), lambda i: (i, 0, 0)),   # conv1 patches (per image)
            pl.BlockSpec((k1, co), lambda i: (0, 0)),        # w1 (BN folded, bf16)
            pl.BlockSpec((1, co), lambda i: (0, 0)),         # b1 (f32)
            pl.BlockSpec((ci, co), lambda i: (0, 0)),        # w_ds (BN folded, bf16)
            pl.BlockSpec((k2, co), lambda i: (0, 0)),        # w2 (BN folded, bf16)
            pl.BlockSpec((1, co), lambda i: (0, 0)),         # b2 + b_ds (f32)
        ],
        out_specs=pl.BlockSpec((1, m, co), lambda i: (i, 0, 0)),
        scratch_shapes=[pltpu.VMEM((ho + 2, wo + 2, co), jnp.float32)],
        compiler_params=pltpu.CompilerParams(
            dimension_semantics=("parallel",),
            vmem_limit_bytes=64 * 1024 * 1024),
        cost_estimate=pl.CostEstimate(flops=flops, transcendentals=0,
                                      bytes_accessed=bytes_accessed),
    )(p1, w1m, b1, wdm, w2m, b2d)

    out = out.reshape(n, ho, wo, co)
    return jnp.transpose(out, (0, 3, 1, 2))                          # NHWC -> NCHW


# --------------------------------- reference -------------------------------------

def _ref_conv(x_nhwc, w_oihw, stride, padding):
    w_hwio = jnp.transpose(w_oihw, (2, 3, 1, 0))
    return lax.conv_general_dilated(
        x_nhwc, w_hwio, window_strides=(stride, stride),
        padding=[(padding, padding), (padding, padding)],
        dimension_numbers=("NHWC", "HWIO", "NHWC"))


def _ref_bn(x, gamma, beta, mean, var, eps=1e-5):
    return (x - mean) / jnp.sqrt(var + eps) * gamma + beta


def resnet_block_reference(x_nchw, params, stride):
    x = jnp.transpose(x_nchw, (0, 2, 3, 1))
    out = _ref_conv(x, params["w1"], stride, 1)
    out = jnp.maximum(_ref_bn(out, *params["bn1"]), 0.0)
    out = _ref_conv(out, params["w2"], 1, 1)
    out = _ref_bn(out, *params["bn2"])
    identity = _ref_bn(_ref_conv(x, params["w_ds"], stride, 0), *params["bn_ds"])
    out = jnp.maximum(out + identity, 0.0)
    return jnp.transpose(out, (0, 3, 1, 2))


# ----------------------------------- main -----------------------------------------

if __name__ == "__main__":
    # Schema: in_channels=4, out_channels=8, stride=2, activation=ReLU (default 1x1 downsample)
    N, C_IN, H, W = 2, 4, 16, 16
    C_OUT, STRIDE = 8, 2

    key = jax.random.PRNGKey(0)
    ks = jax.random.split(key, 8)

    def bn_params(k, c):
        kg, kb, km, kv = jax.random.split(k, 4)
        gamma = 1.0 + 0.1 * jax.random.normal(kg, (c,), jnp.float32)
        beta = 0.1 * jax.random.normal(kb, (c,), jnp.float32)
        mean = 0.1 * jax.random.normal(km, (c,), jnp.float32)
        var = 0.5 + jnp.abs(jax.random.normal(kv, (c,), jnp.float32))
        return (gamma, beta, mean, var)

    params = {
        "w1": 0.2 * jax.random.normal(ks[0], (C_OUT, C_IN, 3, 3), jnp.float32),
        "bn1": bn_params(ks[1], C_OUT),
        "w2": 0.2 * jax.random.normal(ks[2], (C_OUT, C_OUT, 3, 3), jnp.float32),
        "bn2": bn_params(ks[3], C_OUT),
        "w_ds": 0.2 * jax.random.normal(ks[4], (C_OUT, C_IN, 1, 1), jnp.float32),
        "bn_ds": bn_params(ks[5], C_OUT),
    }
    x = jax.random.normal(ks[6], (N, C_IN, H, W), jnp.float32)

    out = jax.block_until_ready(resnet_block_forward(x, params, STRIDE))
    ref = jax.block_until_ready(resnet_block_reference(x, params, STRIDE))

    assert out.shape == (N, C_OUT, H // STRIDE, W // STRIDE), out.shape
    # bf16 matmul operands with f32 accumulation -> bf16-level tolerance vs the f32 reference.
    max_err = float(jnp.max(jnp.abs(out - ref)))
    rel_l2 = float(jnp.linalg.norm(out - ref) / jnp.linalg.norm(ref))
    assert jnp.allclose(out, ref, rtol=2e-2, atol=3e-2), (max_err, rel_l2)
    assert rel_l2 < 1e-2, rel_l2
    print("KERNEL_OK")
</pallas_src>

<mosaic_0001>
module attributes {stable_mosaic.version = 11 : i64} {
  func.func @_fused_resnet_block_kernel(%arg0: i32, %arg1: memref<1x64x36xbf16, #tpu.memory_space<vmem>>, %arg2: memref<36x8xbf16, #tpu.memory_space<vmem>>, %arg3: memref<1x8xf32, #tpu.memory_space<vmem>>, %arg4: memref<4x8xbf16, #tpu.memory_space<vmem>>, %arg5: memref<72x8xbf16, #tpu.memory_space<vmem>>, %arg6: memref<1x8xf32, #tpu.memory_space<vmem>>, %arg7: memref<1x64x8xf32, #tpu.memory_space<vmem>>, %arg8: memref<10x10x8xf32, #tpu.memory_space<vmem>>) attributes {dimension_semantics = [#tpu.dimension_semantics<parallel>], iteration_bounds = array<i64: 2>, scalar_prefetch = 0 : i64, scratch_operands = 1 : i64, tpu.core_type = #tpu.core_type<tc>, window_params = [{transform_indices = @transform_0, window_bounds = array<i64: 1, 64, 36>}, {pipeline_mode = #tpu.pipeline_mode<synchronous>, transform_indices = @transform_1, window_bounds = array<i64: 36, 8>}, {pipeline_mode = #tpu.pipeline_mode<synchronous>, transform_indices = @transform_2, window_bounds = array<i64: 1, 8>}, {pipeline_mode = #tpu.pipeline_mode<synchronous>, transform_indices = @transform_3, window_bounds = array<i64: 4, 8>}, {pipeline_mode = #tpu.pipeline_mode<synchronous>, transform_indices = @transform_4, window_bounds = array<i64: 72, 8>}, {pipeline_mode = #tpu.pipeline_mode<synchronous>, transform_indices = @transform_5, window_bounds = array<i64: 1, 8>}, {transform_indices = @transform_6, window_bounds = array<i64: 1, 64, 8>}]} {
    %c0 = arith.constant 0 : index
    %c0_0 = arith.constant 0 : index
    %c0_1 = arith.constant 0 : index
    %0 = vector.load %arg1[%c0, %c0_0, %c0_1] : memref<1x64x36xbf16, #tpu.memory_space<vmem>>, vector<1x64x36xbf16>
    %1 = vector.shape_cast %0 : vector<1x64x36xbf16> to vector<64x36xbf16>
    %c0_2 = arith.constant 0 : index
    %c0_3 = arith.constant 0 : index
    %2 = vector.load %arg2[%c0_2, %c0_3] : memref<36x8xbf16, #tpu.memory_space<vmem>>, vector<36x8xbf16>
    %cst = arith.constant dense<0.000000e+00> : vector<64x8xf32>
    %3 = tpu.matmul %1, %2, %cst {dimension_numbers = #tpu.dot_dimension_numbers<[1], [0], [0], [1], [0, 0, 1, 1], [], []>} : vector<64x36xbf16>, vector<36x8xbf16>, vector<64x8xf32> -> vector<64x8xf32>
    %c0_4 = arith.constant 0 : index
    %c0_5 = arith.constant 0 : index
    %4 = vector.load %arg3[%c0_4, %c0_5] : memref<1x8xf32, #tpu.memory_space<vmem>>, vector<1x8xf32>
    %5 = vector.broadcast %4 : vector<1x8xf32> to vector<64x8xf32>
    %6 = arith.addf %3, %5 : vector<64x8xf32>
    %cst_6 = arith.constant 0.000000e+00 : f32
    %7 = vector.broadcast %cst_6 : f32 to vector<64x8xf32>
    %8 = arith.maximumf %6, %7 : vector<64x8xf32>
    %9 = vector.extract_strided_slice %1 {offsets = [0, 16], sizes = [64, 4], strides = [1, 1]} : vector<64x36xbf16> to vector<64x4xbf16>
    %c0_7 = arith.constant 0 : index
    %c0_8 = arith.constant 0 : index
    %10 = vector.load %arg4[%c0_7, %c0_8] : memref<4x8xbf16, #tpu.memory_space<vmem>>, vector<4x8xbf16>
    %cst_9 = arith.constant dense<0.000000e+00> : vector<64x8xf32>
    %11 = tpu.matmul %9, %10, %cst_9 {dimension_numbers = #tpu.dot_dimension_numbers<[1], [0], [0], [1], [0, 0, 1, 1], [], []>} : vector<64x4xbf16>, vector<4x8xbf16>, vector<64x8xf32> -> vector<64x8xf32>
    %c0_10 = arith.constant 0 : index
    %c0_11 = arith.constant 0 : index
    %12 = vector.load %arg6[%c0_10, %c0_11] : memref<1x8xf32, #tpu.memory_space<vmem>>, vector<1x8xf32>
    %13 = vector.broadcast %12 : vector<1x8xf32> to vector<64x8xf32>
    %14 = arith.addf %11, %13 : vector<64x8xf32>
    %cst_12 = arith.constant 0.000000e+00 : f32
    %15 = vector.broadcast %cst_12 : f32 to vector<10x10x8xf32>
    %c0_13 = arith.constant 0 : index
    %c0_14 = arith.constant 0 : index
    %c0_15 = arith.constant 0 : index
    %16 = vector.load %arg8[%c0_13, %c0_14, %c0_15] : memref<10x10x8xf32, #tpu.memory_space<vmem>>, vector<10x10x8xf32>
    tpu.vector_store %arg8[%c0_13, %c0_14, %c0_15], %15 {strides = array<i32>} : memref<10x10x8xf32, #tpu.memory_space<vmem>>, vector<10x10x8xf32>,
    %17 = vector.shape_cast %8 : vector<64x8xf32> to vector<8x8x8xf32>
    %c1 = arith.constant 1 : index
    %c1_16 = arith.constant 1 : index
    %c0_17 = arith.constant 0 : index
    %18 = vector.load %arg8[%c1, %c1_16, %c0_17] : memref<10x10x8xf32, #tpu.memory_space<vmem>>, vector<8x8x8xf32>
    tpu.vector_store %arg8[%c1, %c1_16, %c0_17], %17 {strides = array<i32>} : memref<10x10x8xf32, #tpu.memory_space<vmem>>, vector<8x8x8xf32>,
    %c0_18 = arith.constant 0 : index
    %c0_19 = arith.constant 0 : index
    %c0_20 = arith.constant 0 : index
    %19 = vector.load %arg8[%c0_18, %c0_19, %c0_20] : memref<10x10x8xf32, #tpu.memory_space<vmem>>, vector<8x8x8xf32>
    %20 = vector.shape_cast %19 : vector<8x8x8xf32> to vector<64x8xf32>
    %c0_21 = arith.constant 0 : index
    %c1_22 = arith.constant 1 : index
    %c0_23 = arith.constant 0 : index
    %21 = vector.load %arg8[%c0_21, %c1_22, %c0_23] : memref<10x10x8xf32, #tpu.memory_space<vmem>>, vector<8x8x8xf32>
    %22 = vector.shape_cast %21 : vector<8x8x8xf32> to vector<64x8xf32>
    %c0_24 = arith.constant 0 : index
    %c2 = arith.constant 2 : index
    %c0_25 = arith.constant 0 : index
    %23 = vector.load %arg8[%c0_24, %c2, %c0_25] : memref<10x10x8xf32, #tpu.memory_space<vmem>>, vector<8x8x8xf32>
    %24 = vector.shape_cast %23 : vector<8x8x8xf32> to vector<64x8xf32>
    %c1_26 = arith.constant 1 : index
    %c0_27 = arith.constant 0 : index
    %c0_28 = arith.constant 0 : index
    %25 = vector.load %arg8[%c1_26, %c0_27, %c0_28] : memref<10x10x8xf32, #tpu.memory_space<vmem>>, vector<8x8x8xf32>
    %26 = vector.shape_cast %25 : vector<8x8x8xf32> to vector<64x8xf32>
    %c1_29 = arith.constant 1 : index
    %c1_30 = arith.constant 1 : index
    %c0_31 = arith.constant 0 : index
    %27 = vector.load %arg8[%c1_29, %c1_30, %c0_31] : memref<10x10x8xf32, #tpu.memory_space<vmem>>, vector<8x8x8xf32>
    %28 = vector.shape_cast %27 : vector<8x8x8xf32> to vector<64x8xf32>
    %c1_32 = arith.constant 1 : index
    %c2_33 = arith.constant 2 : index
    %c0_34 = arith.constant 0 : index
    %29 = vector.load %arg8[%c1_32, %c2_33, %c0_34] : memref<10x10x8xf32, #tpu.memory_space<vmem>>, vector<8x8x8xf32>
    %30 = vector.shape_cast %29 : vector<8x8x8xf32> to vector<64x8xf32>
    %c2_35 = arith.constant 2 : index
    %c0_36 = arith.constant 0 : index
    %c0_37 = arith.constant 0 : index
    %31 = vector.load %arg8[%c2_35, %c0_36, %c0_37] : memref<10x10x8xf32, #tpu.memory_space<vmem>>, vector<8x8x8xf32>
    %32 = vector.shape_cast %31 : vector<8x8x8xf32> to vector<64x8xf32>
    %c2_38 = arith.constant 2 : index
    %c1_39 = arith.constant 1 : index
    %c0_40 = arith.constant 0 : index
    %33 = vector.load %arg8[%c2_38, %c1_39, %c0_40] : memref<10x10x8xf32, #tpu.memory_space<vmem>>, vector<8x8x8xf32>
    %34 = vector.shape_cast %33 : vector<8x8x8xf32> to vector<64x8xf32>
    %c2_41 = arith.constant 2 : index
    %c2_42 = arith.constant 2 : index
    %c0_43 = arith.constant 0 : index
    %35 = vector.load %arg8[%c2_41, %c2_42, %c0_43] : memref<10x10x8xf32, #tpu.memory_space<vmem>>, vector<8x8x8xf32>
    %36 = vector.shape_cast %35 : vector<8x8x8xf32> to vector<64x8xf32>
    %37 = tpu.concatenate %20, %22, %24, %26, %28, %30, %32, %34, %36 in 1 : vector<64x8xf32>, vector<64x8xf32>, vector<64x8xf32>, vector<64x8xf32>, vector<64x8xf32>, vector<64x8xf32>, vector<64x8xf32>, vector<64x8xf32>, vector<64x8xf32> -> vector<64x72xf32>
    %38 = arith.truncf %37 : vector<64x72xf32> to vector<64x72xbf16>
    %c0_44 = arith.constant 0 : index
    %c0_45 = arith.constant 0 : index
    %39 = vector.load %arg5[%c0_44, %c0_45] : memref<72x8xbf16, #tpu.memory_space<vmem>>, vector<72x8xbf16>
    %cst_46 = arith.constant dense<0.000000e+00> : vector<64x8xf32>
    %40 = tpu.matmul %38, %39, %cst_46 {dimension_numbers = #tpu.dot_dimension_numbers<[1], [0], [0], [1], [0, 0, 1, 1], [], []>} : vector<64x72xbf16>, vector<72x8xbf16>, vector<64x8xf32> -> vector<64x8xf32>
    %41 = arith.addf %14, %40 : vector<64x8xf32>
    %cst_47 = arith.constant 0.000000e+00 : f32
    %42 = vector.broadcast %cst_47 : f32 to vector<64x8xf32>
    %43 = arith.maximumf %41, %42 : vector<64x8xf32>
    %c0_48 = arith.constant 0 : index
    %c0_49 = arith.constant 0 : index
    %c0_50 = arith.constant 0 : index
    %44 = vector.load %arg7[%c0_48, %c0_49, %c0_50] : memref<1x64x8xf32, #tpu.memory_space<vmem>>, vector<1x64x8xf32>
    %45 = vector.shape_cast %44 : vector<1x64x8xf32> to vector<64x8xf32>
    %46 = vector.shape_cast %43 : vector<64x8xf32> to vector<1x64x8xf32>
    tpu.vector_store %arg7[%c0_48, %c0_49, %c0_50], %46 {strides = array<i32>} : memref<1x64x8xf32, #tpu.memory_space<vmem>>, vector<1x64x8xf32>,
    return
  }
  func.func @transform_0(%arg0: i32) -> (i32, i32, i32) {
    %c0_i32 = arith.constant 0 : i32
    %c0_i32_0 = arith.constant 0 : i32
    %c0_i32_1 = arith.constant 0 : i32
    return %arg0, %c0_i32, %c0_i32_0 : i32, i32, i32
  }
  func.func @transform_1(%arg0: i32) -> (i32, i32) {
    %c0_i32 = arith.constant 0 : i32
    %c0_i32_0 = arith.constant 0 : i32
    %c0_i32_1 = arith.constant 0 : i32
    return %c0_i32, %c0_i32_0 : i32, i32
  }
  func.func @transform_2(%arg0: i32) -> (i32, i32) {
    %c0_i32 = arith.constant 0 : i32
    %c0_i32_0 = arith.constant 0 : i32
    %c0_i32_1 = arith.constant 0 : i32
    return %c0_i32, %c0_i32_0 : i32, i32
  }
  func.func @transform_3(%arg0: i32) -> (i32, i32) {
    %c0_i32 = arith.constant 0 : i32
    %c0_i32_0 = arith.constant 0 : i32
    %c0_i32_1 = arith.constant 0 : i32
    return %c0_i32, %c0_i32_0 : i32, i32
  }
  func.func @transform_4(%arg0: i32) -> (i32, i32) {
    %c0_i32 = arith.constant 0 : i32
    %c0_i32_0 = arith.constant 0 : i32
    %c0_i32_1 = arith.constant 0 : i32
    return %c0_i32, %c0_i32_0 : i32, i32
  }
  func.func @transform_5(%arg0: i32) -> (i32, i32) {
    %c0_i32 = arith.constant 0 : i32
    %c0_i32_0 = arith.constant 0 : i32
    %c0_i32_1 = arith.constant 0 : i32
    return %c0_i32, %c0_i32_0 : i32, i32
  }
  func.func @transform_6(%arg0: i32) -> (i32, i32, i32) {
    %c0_i32 = arith.constant 0 : i32
    %c0_i32_0 = arith.constant 0 : i32
    %c0_i32_1 = arith.constant 0 : i32
    return %arg0, %c0_i32, %c0_i32_0 : i32, i32, i32
  }
}

</mosaic_0001>

<llo_original>
// kernel: resnet_block_forward.1
$region0: #{resnet_block_forward.1}
  #allocation0 [shape = 'u32[]', space=smem, size = 0x4, offset = 0x4, fixed_abs, tag = 'smem constant byte address 0x4 - core index']
  #allocation1 [shape = 'u32[144,128]{1,0:T(1,128)}', space=vmem, size = 0x12000, scoped, tag = 'internal scratch']
  #allocation2 [shape = 'f32[10,10,8]{2,1,0:T(8,128)}', space=vmem, size = 0x14000, scoped, tag = 'scratch operand']
  %s0 = inlined_call_operand.vmem [shape: bf16[2,64,36], index: 0, kind: input, shape index: {}]
  %s1 = inlined_call_operand.vmem [shape: bf16[36,8], index: 1, kind: input, shape index: {}]
  %s2 = inlined_call_operand.vmem [shape: f32[1,8], index: 2, kind: input, shape index: {}]
  %s3 = inlined_call_operand.vmem [shape: bf16[4,8], index: 3, kind: input, shape index: {}]
  %s4 = inlined_call_operand.vmem [shape: bf16[72,8], index: 4, kind: input, shape index: {}]
  %s5 = inlined_call_operand.vmem [shape: f32[1,8], index: 5, kind: input, shape index: {}]
  %s6 = inlined_call_operand.vmem [shape: f32[2,64,8], index: 6, kind: output, shape index: {}]
  %s7 = sld [smem:[#allocation0]]
  $region57: #{resnet_block_forward.1} parent=0
    _
  %s9 = ssub.s32 1, %s7
  %s10 = scalar_select 0, %s9, %s7
  loop: start=0, step=1, limit=4
  $region2: #{resnet_block_forward.1} parent=0 // loop_pre_header
    _
  $region3: #{resnet_block_forward.1} parent=0 // loop_header
    %s12 = sphi 0, %s16
    %p13 = scmp.ge.s32.totalorder %s12, 4
    %s22 = sphi 0, %s24
    %s25 = sphi 0, %s22
    %s26 = sphi 0, %s25
    %s42 = sphi 0, %s26
    %s46 = sphi 0, %s46
    %s48 = sphi 0, %s46
    %s49 = sphi 0, %s48
    %s63 = sphi 0, %s49
    %s67 = sphi 0, %s67
    %s69 = sphi 0, %s67
    %s70 = sphi 0, %s69
    %s84 = sphi 0, %s70
    %s88 = sphi 0, %s88
    %s90 = sphi 0, %s88
    %s91 = sphi 0, %s90
    %s105 = sphi 0, %s91
    %s109 = sphi 0, %s109
    %s111 = sphi 0, %s109
    %s112 = sphi 0, %s111
    %s126 = sphi 0, %s112
    %s130 = sphi 0, %s130
    %s132 = sphi 0, %s130
    %s133 = sphi 0, %s132
    %s147 = sphi 0, %s133
    %s153 = sphi 0, %s155
    %s156 = sphi 0, %s153
    %s157 = sphi 0, %s156
    %s173 = sphi 0, %s157
  $region4: #{resnet_block_forward.1} parent=0 // loop_header_branch
    %15 = sbr.rel (%p13) target = $region8
  $region5: #{resnet_block_forward.1} parent=0 // loop_body
    %s17 = ssub.s32 %s12, 1
    %s18 = ssub.s32 %s12, 2
    %s19 = sadd.s32 %s12, 1
    %s20 = ssub.s32 %s12, %s19
    %p21 = scmp.eq.s32.totalorder %s20, 0
    %s23 = sadd.s32 %s22, 1
    %s24 = scalar_select %p21, %s22, %s23
    %p27 = pneg %p21
    %p28 = scmp.eq.s32.totalorder %s12, 1
    %p29 = por %p27, %p28
    %p30 = scmp.ne.s32.totalorder %s22, %s25
    %p31 = scmp.eq.s32.totalorder %s12, 0
    %p32 = por %p30, %p31
    %p33 = scmp.ne.s32.totalorder %s22, %s25
    %p34 = scmp.eq.s32.totalorder %s17, 1
    %p35 = por %p33, %p34
    %p36 = scmp.ne.s32.totalorder %s25, %s26
    %p37 = scmp.eq.s32.totalorder %s17, 0
    %p38 = por %p36, %p37
    %p39 = scmp.ne.s32.totalorder %s25, %s26
    %p40 = scmp.eq.s32.totalorder %s18, 1
    %p41 = por %p39, %p40
    %p43 = scmp.ne.s32.totalorder %s26, %s42
    %p44 = scmp.eq.s32.totalorder %s18, 0
    %p45 = por %p43, %p44
    %s47 = sadd.s32 %s46, 1
    %p50 = scmp.eq.s32.totalorder %s12, 1
    %p51 = scmp.ne.s32.totalorder %s46, %s48
    %p52 = scmp.eq.s32.totalorder %s12, 0
    %p53 = por %p51, %p52
    %p54 = scmp.ne.s32.totalorder %s46, %s48
    %p55 = scmp.eq.s32.totalorder %s17, 1
    %p56 = por %p54, %p55
    %p57 = scmp.ne.s32.totalorder %s48, %s49
    %p58 = scmp.eq.s32.totalorder %s17, 0
    %p59 = por %p57, %p58
    %p60 = scmp.ne.s32.totalorder %s48, %s49
    %p61 = scmp.eq.s32.totalorder %s18, 1
    %p62 = por %p60, %p61
    %p64 = scmp.ne.s32.totalorder %s49, %s63
    %p65 = scmp.eq.s32.totalorder %s18, 0
    %p66 = por %p64, %p65
    %s68 = sadd.s32 %s67, 1
    %p71 = scmp.eq.s32.totalorder %s12, 1
    %p72 = scmp.ne.s32.totalorder %s67, %s69
    %p73 = scmp.eq.s32.totalorder %s12, 0
    %p74 = por %p72, %p73
    %p75 = scmp.ne.s32.totalorder %s67, %s69
    %p76 = scmp.eq.s32.totalorder %s17, 1
    %p77 = por %p75, %p76
    %p78 = scmp.ne.s32.totalorder %s69, %s70
    %p79 = scmp.eq.s32.totalorder %s17, 0
    %p80 = por %p78, %p79
    %p81 = scmp.ne.s32.totalorder %s69, %s70
    %p82 = scmp.eq.s32.totalorder %s18, 1
    %p83 = por %p81, %p82
    %p85 = scmp.ne.s32.totalorder %s70, %s84
    %p86 = scmp.eq.s32.totalorder %s18, 0
    %p87 = por %p85, %p86
    %s89 = sadd.s32 %s88, 1
    %p92 = scmp.eq.s32.totalorder %s12, 1
    %p93 = scmp.ne.s32.totalorder %s88, %s90
    %p94 = scmp.eq.s32.totalorder %s12, 0
    %p95 = por %p93, %p94
    %p96 = scmp.ne.s32.totalorder %s88, %s90
    %p97 = scmp.eq.s32.totalorder %s17, 1
    %p98 = por %p96, %p97
    %p99 = scmp.ne.s32.totalorder %s90, %s91
    %p100 = scmp.eq.s32.totalorder %s17, 0
    %p101 = por %p99, %p100
    %p102 = scmp.ne.s32.totalorder %s90, %s91
    %p103 = scmp.eq.s32.totalorder %s18, 1
    %p104 = por %p102, %p103
    %p106 = scmp.ne.s32.totalorder %s91, %s105
    %p107 = scmp.eq.s32.totalorder %s18, 0
    %p108 = por %p106, %p107
    %s110 = sadd.s32 %s109, 1
    %p113 = scmp.eq.s32.totalorder %s12, 1
    %p114 = scmp.ne.s32.totalorder %s109, %s111
    %p115 = scmp.eq.s32.totalorder %s12, 0
    %p116 = por %p114, %p115
    %p117 = scmp.ne.s32.totalorder %s109, %s111
    %p118 = scmp.eq.s32.totalorder %s17, 1
    %p119 = por %p117, %p118
    %p120 = scmp.ne.s32.totalorder %s111, %s112
    %p121 = scmp.eq.s32.totalorder %s17, 0
    %p122 = por %p120, %p121
    %p123 = scmp.ne.s32.totalorder %s111, %s112
    %p124 = scmp.eq.s32.totalorder %s18, 1
    %p125 = por %p123, %p124
    %p127 = scmp.ne.s32.totalorder %s112, %s126
    %p128 = scmp.eq.s32.totalorder %s18, 0
    %p129 = por %p127, %p128
    %s131 = sadd.s32 %s130, 1
    %p134 = scmp.eq.s32.totalorder %s12, 1
    %p135 = scmp.ne.s32.totalorder %s130, %s132
    %p136 = scmp.eq.s32.totalorder %s12, 0
    %p137 = por %p135, %p136
    %p138 = scmp.ne.s32.totalorder %s130, %s132
    %p139 = scmp.eq.s32.totalorder %s17, 1
    %p140 = por %p138, %p139
    %p141 = scmp.ne.s32.totalorder %s132, %s133
    %p142 = scmp.eq.s32.totalorder %s17, 0
    %p143 = por %p141, %p142
    %p144 = scmp.ne.s32.totalorder %s132, %s133
    %p145 = scmp.eq.s32.totalorder %s18, 1
    %p146 = por %p144, %p145
    %p148 = scmp.ne.s32.totalorder %s133, %s147
    %p149 = scmp.eq.s32.totalorder %s18, 0
    %p150 = por %p148, %p149
    %s151 = ssub.s32 %s12, %s19
    %p152 = scmp.eq.s32.totalorder %s151, 0
    %s154 = sadd.s32 %s153, 1
    %s155 = scalar_select %p152, %s153, %s154
    %p158 = pneg %p152
    %p159 = scmp.eq.s32.totalorder %s12, 1
    %p160 = por %p158, %p159
    %p161 = scmp.ne.s32.totalorder %s153, %s156
    %p162 = scmp.eq.s32.totalorder %s12, 0
    %p163 = por %p161, %p162
    %p164 = scmp.ne.s32.totalorder %s153, %s156
    %p165 = scmp.eq.s32.totalorder %s17, 1
    %p166 = por %p164, %p165
    %p167 = scmp.ne.s32.totalorder %s156, %s157
    %p168 = scmp.eq.s32.totalorder %s17, 0
    %p169 = por %p167, %p168
    %p170 = scmp.ne.s32.totalorder %s156, %s157
    %p171 = scmp.eq.s32.totalorder %s18, 1
    %p172 = por %p170, %p171
    %p174 = scmp.ne.s32.totalorder %s157, %s173
    %p175 = scmp.eq.s32.totalorder %s18, 0
    %p176 = por %p174, %p175
    %p177 = scmp.le.s32.totalorder 1, %s12
    %p178 = scmp.lt.s32.totalorder %s12, 3
    %p179 = pnand %p177, %p178
    %p180 = pneg %p179
    // Predicated region
    $region9: #{resnet_block_forward.1} parent=5 // pred_check
      _
    $region10: #{resnet_block_forward.1} parent=5 // pred_check_branch
      %182 = sbr.rel (%p179) target = $region12
    $region11: #{resnet_block_forward.1} parent=5 // pred_region
      %s183 = ssub.s32 %s12, 1
      // Predicated region
      $region13: #{resnet_block_forward.1} parent=11 // pred_check
        %p184 = pneg %p59
      $region14: #{resnet_block_forward.1} parent=11 // pred_check_branch
        %186 = sbr.rel (%p184) target = $region16
      $region15: #{resnet_block_forward.1} parent=11 // pred_region
        _
      $region16: #{resnet_block_forward.1} parent=11 // pred_fallthru
        _
      // Predicated region
      $region17: #{resnet_block_forward.1} parent=11 // pred_check
        %p187 = pneg %p80
      $region18: #{resnet_block_forward.1} parent=11 // pred_check_branch
        %189 = sbr.rel (%p187) target = $region20
      $region19: #{resnet_block_forward.1} parent=11 // pred_region
        _
      $region20: #{resnet_block_forward.1} parent=11 // pred_fallthru
        _
      // Predicated region
      $region21: #{resnet_block_forward.1} parent=11 // pred_check
        %p190 = pneg %p101
      $region22: #{resnet_block_forward.1} parent=11 // pred_check_branch
        %192 = sbr.rel (%p190) target = $region24
      $region23: #{resnet_block_forward.1} parent=11 // pred_region
        _
      $region24: #{resnet_block_forward.1} parent=11 // pred_fallthru
        _
      // Predicated region
      $region25: #{resnet_block_forward.1} parent=11 // pred_check
        %p193 = pneg %p122
      $region26: #{resnet_block_forward.1} parent=11 // pred_check_branch
        %195 = sbr.rel (%p193) target = $region28
      $region27: #{resnet_block_forward.1} parent=11 // pred_region
        _
      $region28: #{resnet_block_forward.1} parent=11 // pred_fallthru
        _
      // Predicated region
      $region29: #{resnet_block_forward.1} parent=11 // pred_check
        %p196 = pneg %p143
      $region30: #{resnet_block_forward.1} parent=11 // pred_check_branch
        %198 = sbr.rel (%p196) target = $region32
      $region31: #{resnet_block_forward.1} parent=11 // pred_region
        _
      $region32: #{resnet_block_forward.1} parent=11 // pred_fallthru
        _
    $region12: #{resnet_block_forward.1} parent=5 // pred_fallthru
      _
    %p199 = scmp.lt.s32.totalorder %s12, 2
    // Predicated region
    $region33: #{resnet_block_forward.1} parent=5 // pred_check
      %p200 = pneg %p199
    $region34: #{resnet_block_forward.1} parent=5 // pred_check_branch
      %202 = sbr.rel (%p200) target = $region36
    $region35: #{resnet_block_forward.1} parent=5 // pred_region
      // Predicated region
      $region37: #{resnet_block_forward.1} parent=35 // pred_check
        %p203 = pneg %p32
      $region38: #{resnet_block_forward.1} parent=35 // pred_check_branch
        %205 = sbr.rel (%p203) target = $region40
      $region39: #{resnet_block_forward.1} parent=35 // pred_region
        %p206 = scmp.lt.s32.totalorder %s12, 1
        %s207 = scalar_select %p206, %s12, 1
        %s208 = smul.addr %s207, 8
        %s209 = smul.addr %s208, 4
        %s210 = scalar_lea.vmem %s0, %s209
      $region40: #{resnet_block_forward.1} parent=35 // pred_fallthru
        _
    $region36: #{resnet_block_forward.1} parent=5 // pred_fallthru
      _
    %p211 = scmp.le.s32.totalorder 1, %s12
    %p212 = scmp.lt.s32.totalorder %s12, 3
    %p213 = pnand %p211, %p212
    %p214 = pneg %p213
    // Predicated region
    $region41: #{resnet_block_forward.1} parent=5 // pred_check
      _
    $region42: #{resnet_block_forward.1} parent=5 // pred_check_branch
      %216 = sbr.rel (%p213) target = $region44
    $region43: #{resnet_block_forward.1} parent=5 // pred_region
      %s217 = ssub.s32 %s12, 1
      %p218 = scmp.lt.s32.totalorder %s17, 1
      %s219 = scalar_select %p218, %s17, 1
      %s220 = smul.addr %s219, 8
      %s221 = smul.addr %s220, 4
      %s222 = scalar_lea.vmem %s0, %s221
      %p223 = pneg %p38
      %p224 = pneg %p35
      %p225 = pneg %p59
      %p226 = pneg %p56
      %p227 = pneg %p80
      %p228 = pneg %p77
      %p229 = pneg %p101
      %p230 = pneg %p98
      %p231 = pneg %p122
      %p232 = pneg %p119
      %p233 = pneg %p143
      %p234 = pneg %p140
      %p235 = pneg %p169
      %p236 = pneg %p166
      %p237 = scmp.lt.s32.totalorder %s17, 1
      %s238 = scalar_select %p237, %s17, 1
      %s239 = smul.addr %s238, 8
      %s240 = smul.addr %s239, 8
      %s241 = scalar_lea.vmem %s6, %s240
      %p242 = scmp.lt.s32.totalorder %s17, 1
      %s243 = scalar_select %p242, %s17, 1
      %s244 = smul.addr %s243, 8
      %s245 = smul.addr %s244, 4
      %s246 = scalar_lea.vmem %s0, %s245
      %p247 = scmp.lt.s32.totalorder %s17, 1
      %s248 = scalar_select %p247, %s17, 1
      %s249 = smul.addr %s248, 8
      %s250 = smul.addr %s249, 8
      %s251 = scalar_lea.vmem %s6, %s250
      %v253 = vld [vmem:[%s246] sm:$0xf]
      %v254 = vld [vmem:[%s246 + $0x4] sm:$0xf]
      %v255 = vld [vmem:[%s246 + $0x8] sm:$0xf]
      %v256 = vld [vmem:[%s246 + $0xc] sm:$0xf]
      %v257 = vld [vmem:[%s246 + $0x10] sm:$0xf]
      %v258 = vld [vmem:[%s246 + $0x14] sm:$0xf]
      %v259 = vld [vmem:[%s246 + $0x18] sm:$0xf]
      %v260 = vld [vmem:[%s246 + $0x1c] sm:$0xf]
      %v261 = vld [vmem:[%s1] sm:$0xf]
      %v262 = vld [vmem:[%s1 + $0x4] sm:$0xf]
      %v263 = vld [vmem:[%s1 + $0x8] sm:$0xf]
      %v264 = vld [vmem:[%s1 + $0xc] sm:$0xf]
      %v265 = vld [vmem:[%s1 + $0x10] sm:$0x3]
      %v266 = vld [vmem:[%s2] sm:$0x1]
      %v268 = vlaneseq
      %v269 = vshrl.u32 %v268, 7
      %v270 = vsub.s32 0, %v269
      %v271 = vrot.slane %v266, %v270
      %v281 = vunpack.c.l.b16 %v253
      %v282 = vunpack.c.l.b16 %v254
      %v283 = vunpack.c.l.b16 %v255
      %v284 = vunpack.c.l.b16 %v256
      %v285 = vunpack.c.l.b16 %v257
      %v286 = vunpack.c.l.b16 %v258
      %v287 = vunpack.c.l.b16 %v259
      %v288 = vunpack.c.l.b16 %v260
      %v289 = vpack.c.b16 %v282, %v281
      %v290 = vpack.c.b16 %v284, %v283
      %v291 = vpack.c.b16 %v286, %v285
      %v292 = vpack.c.b16 %v288, %v287
      %v298 = vunpack.c.l.b16 %v261
      %v299 = vunpack.c.l.b16 %v262
      %v300 = vunpack.c.l.b16 %v263
      %v301 = vunpack.c.l.b16 %v264
      %v302 = vunpack.c.l.b16 %v265
      %v303 = vpack.c.b16 %v299, %v298
      %v304 = vpack.c.b16 %v301, %v300
      %v305 = vpack.c.b16 %v302, %v302
      %vm308 = vcmask 293888
      %v310 = vsel %vm308, %v289, 0
      %v313 = vsel %vm308, %v290, 0
      %v316 = vsel %vm308, %v291, 0
      %v319 = vsel %vm308, %v292, 0
      %vm321 = vcmask 1041408
      %v323 = vsel %vm321, %v305, 0
      %325 = vmatprep.subr.bf16.mxu0 0
      %326 = vmatpush1.bf16.msra.mxu0 0
      %327 = vmatprep.subr.bf16.mxu0 0
      %328 = vmatpush1.bf16.msra.mxu0 0
      %329 = vmatprep.subr.bf16.mxu0 0
      %330 = vmatpush1.bf16.msra.mxu0 0
      %331 = vmatprep.subr.bf16.mxu0 0
      %332 = vmatpush1.bf16.msra.mxu0 0
      %333 = vmatprep.subr.bf16.mxu0 0
      %334 = vmatpush1.bf16.msra.mxu0 0
      %335 = vmatprep.subr.bf16.mxu0 0
      %336 = vmatpush1.bf16.msra.mxu0 %v323
      %337 = vmatprep.subr.bf16.mxu0 0
      %338 = vmatpush1.bf16.msra.mxu0 %v304
      %339 = vmatprep.subr.bf16.mxu0 0
      %340 = vmatpush1.bf16.msra.mxu0 %v303
      %341 = vmatprep.subr.bf16.mxu0 0
      %342 = vmatpush2.bf16.msra.mxu0 0
      %343 = vmatprep.subr.bf16.mxu0 0
      %344 = vmatpush2.bf16.msra.mxu0 0
      %345 = vmatprep.subr.bf16.mxu0 0
      %346 = vmatpush2.bf16.msra.mxu0 0
      %347 = vmatprep.subr.bf16.mxu0 0
      %348 = vmatpush2.bf16.msra.mxu0 0
      %349 = vmatprep.subr.bf16.mxu0 0
      %350 = vmatpush2.bf16.msra.mxu0 0
      %351 = vmatprep.subr.bf16.mxu0 0
      %352 = vmatpush2.bf16.msra.mxu0 0
      %353 = vmatprep.subr.bf16.mxu0 0
      %354 = vmatpush2.bf16.msra.mxu0 0
      %355 = vmatprep.subr.bf16.mxu0 0
      %356 = vmatpush2.bf16.msra.mxu0 0
      %357 = vmatprep.mubr.bf16.mxu0 0
      %358 = vmatmul.mubr.bf16.gmra.mxu0 %v310
      %v359 = vpop.f32.mrf.mxu0
      %v360 = vadd.f32 %v271, %v359
      %v361 = vpop.f32.mrf.mxu0
      %v362 = vpop.f32.mrf.mxu0
      %v363 = vadd.f32 %v271, %v362
      %v364 = vpop.f32.mrf.mxu0
      %365 = vmatprep.mubr.bf16.mxu0 0
      %366 = vmatmul.mubr.bf16.gmra.mxu0 %v313
      %v367 = vpop.f32.mrf.mxu0
      %v368 = vadd.f32 %v271, %v367
      %v369 = vpop.f32.mrf.mxu0
      %v370 = vpop.f32.mrf.mxu0
      %v371 = vadd.f32 %v271, %v370
      %v372 = vpop.f32.mrf.mxu0
      %373 = vmatprep.mubr.bf16.mxu0 0
      %374 = vmatmul.mubr.bf16.gmra.mxu0 %v316
      %v375 = vpop.f32.mrf.mxu0
      %v376 = vadd.f32 %v271, %v375
      %v377 = vpop.f32.mrf.mxu0
      %v378 = vpop.f32.mrf.mxu0
      %v379 = vadd.f32 %v271, %v378
      %v380 = vpop.f32.mrf.mxu0
      %381 = vmatprep.mubr.bf16.mxu0 0
      %382 = vmatmul.mubr.bf16.gmra.mxu0 %v319
      %v383 = vpop.f32.mrf.mxu0
      %v384 = vadd.f32 %v271, %v383
      %v385 = vpop.f32.mrf.mxu0
      %v386 = vpop.f32.mrf.mxu0
      %v387 = vadd.f32 %v271, %v386
      %v388 = vpop.f32.mrf.mxu0
      %389 = vdwg.mxu0
      %v390 = vmax.f32 %v360, 0.0
      %v391 = vmax.f32 %v363, 0.0
      %v392 = vmax.f32 %v368, 0.0
      %v393 = vmax.f32 %v371, 0.0
      %v394 = vmax.f32 %v376, 0.0
      %v395 = vmax.f32 %v379, 0.0
      %v396 = vmax.f32 %v384, 0.0
      %v397 = vmax.f32 %v387, 0.0
      %v398 = vld [vmem:[%s3] sm:$0x3]
      %v399 = vld [vmem:[%s5] sm:$0x1]
      %v401 = vlaneseq
      %v402 = vshrl.u32 %v401, 7
      %v403 = vsub.s32 0, %v402
      %v404 = vrot.slane %v399, %v403
      %406 = vrot.lane.b32.xlu0 %v289, 112
      %v407 = vpop.permute.xlu0 %406
      %408 = vrot.lane.b32.xlu0 %v290, 112
      %v409 = vpop.permute.xlu0 %408
      %410 = vrot.lane.b32.xlu0 %v291, 112
      %v411 = vpop.permute.xlu0 %410
      %412 = vrot.lane.b32.xlu0 %v292, 112
      %v413 = vpop.permute.xlu0 %412
      %vm414 = vcmask 31744
      %v416 = vsel %vm414, %v407, 0
      %v419 = vsel %vm414, %v409, 0
      %v422 = vsel %vm414, %v411, 0
      %v425 = vsel %vm414, %v413, 0
      %v428 = vsel %vm321, %v398, 0
      %430 = vmatprep.subr.bf16.mxu0 0
      %431 = vmatpush1.bf16.msra.mxu0 0
      %432 = vmatprep.subr.bf16.mxu0 0
      %433 = vmatpush1.bf16.msra.mxu0 0
      %434 = vmatprep.subr.bf16.mxu0 0
      %435 = vmatpush1.bf16.msra.mxu0 0
      %436 = vmatprep.subr.bf16.mxu0 0
      %437 = vmatpush1.bf16.msra.mxu0 0
      %438 = vmatprep.subr.bf16.mxu0 0
      %439 = vmatpush1.bf16.msra.mxu0 0
      %440 = vmatprep.subr.bf16.mxu0 0
      %441 = vmatpush1.bf16.msra.mxu0 0
      %442 = vmatprep.subr.bf16.mxu0 0
      %443 = vmatpush1.bf16.msra.mxu0 0
      %444 = vmatprep.subr.bf16.mxu0 0
      %445 = vmatpush1.bf16.msra.mxu0 %v428
      %446 = vmatprep.subr.bf16.mxu0 0
      %447 = vmatpush2.bf16.msra.mxu0 0
      %448 = vmatprep.subr.bf16.mxu0 0
      %449 = vmatpush2.bf16.msra.mxu0 0
      %450 = vmatprep.subr.bf16.mxu0 0
      %451 = vmatpush2.bf16.msra.mxu0 0
      %452 = vmatprep.subr.bf16.mxu0 0
      %453 = vmatpush2.bf16.msra.mxu0 0
      %454 = vmatprep.subr.bf16.mxu0 0
      %455 = vmatpush2.bf16.msra.mxu0 0
      %456 = vmatprep.subr.bf16.mxu0 0
      %457 = vmatpush2.bf16.msra.mxu0 0
      %458 = vmatprep.subr.bf16.mxu0 0
      %459 = vmatpush2.bf16.msra.mxu0 0
      %460 = vmatprep.subr.bf16.mxu0 0
      %461 = vmatpush2.bf16.msra.mxu0 0
      %462 = vmatprep.mubr.bf16.mxu0 0
      %463 = vmatmul.mubr.bf16.gmra.mxu0 %v416
      %v464 = vpop.f32.mrf.mxu0
      %v465 = vadd.f32 %v404, %v464
      %v466 = vpop.f32.mrf.mxu0
      %v467 = vpop.f32.mrf.mxu0
      %v468 = vadd.f32 %v404, %v467
      %v469 = vpop.f32.mrf.mxu0
      %470 = vmatprep.mubr.bf16.mxu0 0
      %471 = vmatmul.mubr.bf16.gmra.mxu0 %v419
      %v472 = vpop.f32.mrf.mxu0
      %v473 = vadd.f32 %v404, %v472
      %v474 = vpop.f32.mrf.mxu0
      %v475 = vpop.f32.mrf.mxu0
      %v476 = vadd.f32 %v404, %v475
      %v477 = vpop.f32.mrf.mxu0
      %478 = vmatprep.mubr.bf16.mxu0 0
      %479 = vmatmul.mubr.bf16.gmra.mxu0 %v422
      %v480 = vpop.f32.mrf.mxu0
      %v481 = vadd.f32 %v404, %v480
      %v482 = vpop.f32.mrf.mxu0
      %v483 = vpop.f32.mrf.mxu0
      %v484 = vadd.f32 %v404, %v483
      %v485 = vpop.f32.mrf.mxu0
      %486 = vmatprep.mubr.bf16.mxu0 0
      %487 = vmatmul.mubr.bf16.gmra.mxu0 %v425
      %v488 = vpop.f32.mrf.mxu0
      %v489 = vadd.f32 %v404, %v488
      %v490 = vpop.f32.mrf.mxu0
      %v491 = vpop.f32.mrf.mxu0
      %v492 = vadd.f32 %v404, %v491
      %v493 = vpop.f32.mrf.mxu0
      %494 = vdwg.mxu0
      %vm495 = vcmask 64512
      %496 = vst.msk [vmem:[#allocation2] sm:$0xff] %vm495, 0.0
      %vm497 = vcmask 58368
      %498 = vst.msk [vmem:[#allocation2 + $0x8] sm:$0x3] %vm497, 0.0
      %499 = vst.msk [vmem:[#allocation2 + $0x10] sm:$0xff] %vm495, 0.0
      %500 = vst.msk [vmem:[#allocation2 + $0x18] sm:$0x3] %vm497, 0.0
      %501 = vst.msk [vmem:[#allocation2 + $0x20] sm:$0xff] %vm495, 0.0
      %502 = vst.msk [vmem:[#allocation2 + $0x28] sm:$0x3] %vm497, 0.0
      %503 = vst.msk [vmem:[#allocation2 + $0x30] sm:$0xff] %vm495, 0.0
      %504 = vst.msk [vmem:[#allocation2 + $0x38] sm:$0x3] %vm497, 0.0
      %505 = vst.msk [vmem:[#allocation2 + $0x40] sm:$0xff] %vm495, 0.0
      %506 = vst.msk [vmem:[#allocation2 + $0x48] sm:$0x3] %vm497, 0.0
      %507 = vst.msk [vmem:[#allocation2 + $0x50] sm:$0xff] %vm495, 0.0
      %508 = vst.msk [vmem:[#allocation2 + $0x58] sm:$0x3] %vm497, 0.0
      %509 = vst.msk [vmem:[#allocation2 + $0x60] sm:$0xff] %vm495, 0.0
      %510 = vst.msk [vmem:[#allocation2 + $0x68] sm:$0x3] %vm497, 0.0
      %511 = vst.msk [vmem:[#allocation2 + $0x70] sm:$0xff] %vm495, 0.0
      %512 = vst.msk [vmem:[#allocation2 + $0x78] sm:$0x3] %vm497, 0.0
      %513 = vst.msk [vmem:[#allocation2 + $0x80] sm:$0xff] %vm495, 0.0
      %514 = vst.msk [vmem:[#allocation2 + $0x88] sm:$0x3] %vm497, 0.0
      %515 = vst.msk [vmem:[#allocation2 + $0x90] sm:$0xff] %vm495, 0.0
      %516 = vst.msk [vmem:[#allocation2 + $0x98] sm:$0x3] %vm497, 0.0
      %s517 = scalar_lea.vmem [#allocation2], 16
      %518 = vst.msk [vmem:[%s517 + $0x1] sm:$0xff] %vm495, %v390
      %519 = vst.msk [vmem:[%s517 + $0x11] sm:$0xff] %vm495, %v391
      %520 = vst.msk [vmem:[%s517 + $0x21] sm:$0xff] %vm495, %v392
      %521 = vst.msk [vmem:[%s517 + $0x31] sm:$0xff] %vm495, %v393
      %522 = vst.msk [vmem:[%s517 + $0x41] sm:$0xff] %vm495, %v394
      %523 = vst.msk [vmem:[%s517 + $0x51] sm:$0xff] %vm495, %v395
      %524 = vst.msk [vmem:[%s517 + $0x61] sm:$0xff] %vm495, %v396
      %525 = vst.msk [vmem:[%s517 + $0x71] sm:$0xff] %vm495, %v397
      %v526 = vld [vmem:[#allocation2] sm:$0xff]
      %v527 = vld [vmem:[#allocation2 + $0x10] sm:$0xff]
      %v528 = vld [vmem:[#allocation2 + $0x20] sm:$0xff]
      %v529 = vld [vmem:[#allocation2 + $0x30] sm:$0xff]
      %v530 = vld [vmem:[#allocation2 + $0x40] sm:$0xff]
      %v531 = vld [vmem:[#allocation2 + $0x50] sm:$0xff]
      %v532 = vld [vmem:[#allocation2 + $0x60] sm:$0xff]
      %v533 = vld [vmem:[#allocation2 + $0x70] sm:$0xff]
      %v534 = vld [vmem:[#allocation2 + $0x1] sm:$0xff]
      %v535 = vld [vmem:[#allocation2 + $0x11] sm:$0xff]
      %v536 = vld [vmem:[#allocation2 + $0x21] sm:$0xff]
      %v537 = vld [vmem:[#allocation2 + $0x31] sm:$0xff]
      %v538 = vld [vmem:[#allocation2 + $0x41] sm:$0xff]
      %v539 = vld [vmem:[#allocation2 + $0x51] sm:$0xff]
      %v540 = vld [vmem:[#allocation2 + $0x61] sm:$0xff]
      %v541 = vld [vmem:[#allocation2 + $0x71] sm:$0xff]
      %v542 = vld [vmem:[#allocation2 + $0x2] sm:$0xff]
      %v543 = vld [vmem:[#allocation2 + $0x12] sm:$0xff]
      %v544 = vld [vmem:[#allocation2 + $0x22] sm:$0xff]
      %v545 = vld [vmem:[#allocation2 + $0x32] sm:$0xff]
      %v546 = vld [vmem:[#allocation2 + $0x42] sm:$0xff]
      %v547 = vld [vmem:[#allocation2 + $0x52] sm:$0xff]
      %v548 = vld [vmem:[#allocation2 + $0x62] sm:$0xff]
      %v549 = vld [vmem:[#allocation2 + $0x72] sm:$0xff]
      %v550 = vld [vmem:[%s517] sm:$0xff]
      %v551 = vld [vmem:[%s517 + $0x10] sm:$0xff]
      %v552 = vld [vmem:[%s517 + $0x20] sm:$0xff]
      %v553 = vld [vmem:[%s517 + $0x30] sm:$0xff]
      %v554 = vld [vmem:[%s517 + $0x40] sm:$0xff]
      %v555 = vld [vmem:[%s517 + $0x50] sm:$0xff]
      %v556 = vld [vmem:[%s517 + $0x60] sm:$0xff]
      %v557 = vld [vmem:[%s517 + $0x70] sm:$0xff]
      %v558 = vld [vmem:[%s517 + $0x1] sm:$0xff]
      %v559 = vld [vmem:[%s517 + $0x11] sm:$0xff]
      %v560 = vld [vmem:[%s517 + $0x21] sm:$0xff]
      %v561 = vld [vmem:[%s517 + $0x31] sm:$0xff]
      %v562 = vld [vmem:[%s517 + $0x41] sm:$0xff]
      %v563 = vld [vmem:[%s517 + $0x51] sm:$0xff]
      %v564 = vld [vmem:[%s517 + $0x61] sm:$0xff]
      %v565 = vld [vmem:[%s517 + $0x71] sm:$0xff]
      %v566 = vld [vmem:[%s517 + $0x2] sm:$0xff]
      %v567 = vld [vmem:[%s517 + $0x12] sm:$0xff]
      %v568 = vld [vmem:[%s517 + $0x22] sm:$0xff]
      %v569 = vld [vmem:[%s517 + $0x32] sm:$0xff]
      %v570 = vld [vmem:[%s517 + $0x42] sm:$0xff]
      %v571 = vld [vmem:[%s517 + $0x52] sm:$0xff]
      %v572 = vld [vmem:[%s517 + $0x62] sm:$0xff]
      %v573 = vld [vmem:[%s517 + $0x72] sm:$0xff]
      %s574 = scalar_lea.vmem [#allocation2], 32
      %v575 = vld [vmem:[%s574] sm:$0xff]
      %v576 = vld [vmem:[%s574 + $0x10] sm:$0xff]
      %v577 = vld [vmem:[%s574 + $0x20] sm:$0xff]
      %v578 = vld [vmem:[%s574 + $0x30] sm:$0xff]
      %v579 = vld [vmem:[%s574 + $0x40] sm:$0xff]
      %v580 = vld [vmem:[%s574 + $0x50] sm:$0xff]
      %v581 = vld [vmem:[%s574 + $0x60] sm:$0xff]
      %v582 = vld [vmem:[%s574 + $0x70] sm:$0xff]
      %v583 = vld [vmem:[%s574 + $0x1] sm:$0xff]
      %v584 = vld [vmem:[%s574 + $0x11] sm:$0xff]
      %v585 = vld [vmem:[%s574 + $0x21] sm:$0xff]
      %v586 = vld [vmem:[%s574 + $0x31] sm:$0xff]
      %v587 = vld [vmem:[%s574 + $0x41] sm:$0xff]
      %v588 = vld [vmem:[%s574 + $0x51] sm:$0xff]
      %v589 = vld [vmem:[%s574 + $0x61] sm:$0xff]
      %v590 = vld [vmem:[%s574 + $0x71] sm:$0xff]
      %v591 = vld [vmem:[%s574 + $0x2] sm:$0xff]
      %v592 = vld [vmem:[%s574 + $0x12] sm:$0xff]
      %v593 = vld [vmem:[%s574 + $0x22] sm:$0xff]
      %v594 = vld [vmem:[%s574 + $0x32] sm:$0xff]
      %v595 = vld [vmem:[%s574 + $0x42] sm:$0xff]
      %v596 = vld [vmem:[%s574 + $0x52] sm:$0xff]
      %v597 = vld [vmem:[%s574 + $0x62] sm:$0xff]
      %v598 = vld [vmem:[%s574 + $0x72] sm:$0xff]
      %607 = vrot.lane.b32.xlu0 %v534, 8
      %v608 = vpop.permute.xlu0 %607
      %609 = vrot.lane.b32.xlu0 %v535, 8
      %v610 = vpop.permute.xlu0 %609
      %611 = vrot.lane.b32.xlu0 %v536, 8
      %v612 = vpop.permute.xlu0 %611
      %613 = vrot.lane.b32.xlu0 %v537, 8
      %v614 = vpop.permute.xlu0 %613
      %615 = vrot.lane.b32.xlu0 %v538, 8
      %v616 = vpop.permute.xlu0 %615
      %617 = vrot.lane.b32.xlu0 %v539, 8
      %v618 = vpop.permute.xlu0 %617
      %619 = vrot.lane.b32.xlu0 %v540, 8
      %v620 = vpop.permute.xlu0 %619
      %621 = vrot.lane.b32.xlu0 %v541, 8
      %v622 = vpop.permute.xlu0 %621
      %639 = vrot.lane.b32.xlu0 %v542, 16
      %v640 = vpop.permute.xlu0 %639
      %641 = vrot.lane.b32.xlu0 %v543, 16
      %v642 = vpop.permute.xlu0 %641
      %643 = vrot.lane.b32.xlu0 %v544, 16
      %v644 = vpop.permute.xlu0 %643
      %645 = vrot.lane.b32.xlu0 %v545, 16
      %v646 = vpop.permute.xlu0 %645
      %647 = vrot.lane.b32.xlu0 %v546, 16
      %v648 = vpop.permute.xlu0 %647
      %649 = vrot.lane.b32.xlu0 %v547, 16
      %v650 = vpop.permute.xlu0 %649
      %651 = vrot.lane.b32.xlu0 %v548, 16
      %v652 = vpop.permute.xlu0 %651
      %653 = vrot.lane.b32.xlu0 %v549, 16
      %v654 = vpop.permute.xlu0 %653
      %671 = vrot.lane.b32.xlu0 %v550, 24
      %v672 = vpop.permute.xlu0 %671
      %673 = vrot.lane.b32.xlu0 %v551, 24
      %v674 = vpop.permute.xlu0 %673
      %675 = vrot.lane.b32.xlu0 %v552, 24
      %v676 = vpop.permute.xlu0 %675
      %677 = vrot.lane.b32.xlu0 %v553, 24
      %v678 = vpop.permute.xlu0 %677
      %679 = vrot.lane.b32.xlu0 %v554, 24
      %v680 = vpop.permute.xlu0 %679
      %681 = vrot.lane.b32.xlu0 %v555, 24
      %v682 = vpop.permute.xlu0 %681
      %683 = vrot.lane.b32.xlu0 %v556, 24
      %v684 = vpop.permute.xlu0 %683
      %685 = vrot.lane.b32.xlu0 %v557, 24
      %v686 = vpop.permute.xlu0 %685
      %703 = vrot.lane.b32.xlu0 %v558, 32
      %v704 = vpop.permute.xlu0 %703
      %705 = vrot.lane.b32.xlu0 %v559, 32
      %v706 = vpop.permute.xlu0 %705
      %707 = vrot.lane.b32.xlu0 %v560, 32
      %v708 = vpop.permute.xlu0 %707
      %709 = vrot.lane.b32.xlu0 %v561, 32
      %v710 = vpop.permute.xlu0 %709
      %711 = vrot.lane.b32.xlu0 %v562, 32
      %v712 = vpop.permute.xlu0 %711
      %713 = vrot.lane.b32.xlu0 %v563, 32
      %v714 = vpop.permute.xlu0 %713
      %715 = vrot.lane.b32.xlu0 %v564, 32
      %v716 = vpop.permute.xlu0 %715
      %717 = vrot.lane.b32.xlu0 %v565, 32
      %v718 = vpop.permute.xlu0 %717
      %735 = vrot.lane.b32.xlu0 %v566, 40
      %v736 = vpop.permute.xlu0 %735
      %737 = vrot.lane.b32.xlu0 %v567, 40
      %v738 = vpop.permute.xlu0 %737
      %739 = vrot.lane.b32.xlu0 %v568, 40
      %v740 = vpop.permute.xlu0 %739
      %741 = vrot.lane.b32.xlu0 %v569, 40
      %v742 = vpop.permute.xlu0 %741
      %743 = vrot.lane.b32.xlu0 %v570, 40
      %v744 = vpop.permute.xlu0 %743
      %745 = vrot.lane.b32.xlu0 %v571, 40
      %v746 = vpop.permute.xlu0 %745
      %747 = vrot.lane.b32.xlu0 %v572, 40
      %v748 = vpop.permute.xlu0 %747
      %749 = vrot.lane.b32.xlu0 %v573, 40
      %v750 = vpop.permute.xlu0 %749
      %767 = vrot.lane.b32.xlu0 %v575, 48
      %v768 = vpop.permute.xlu0 %767
      %769 = vrot.lane.b32.xlu0 %v576, 48
      %v770 = vpop.permute.xlu0 %769
      %771 = vrot.lane.b32.xlu0 %v577, 48
      %v772 = vpop.permute.xlu0 %771
      %773 = vrot.lane.b32.xlu0 %v578, 48
      %v774 = vpop.permute.xlu0 %773
      %775 = vrot.lane.b32.xlu0 %v579, 48
      %v776 = vpop.permute.xlu0 %775
      %777 = vrot.lane.b32.xlu0 %v580, 48
      %v778 = vpop.permute.xlu0 %777
      %779 = vrot.lane.b32.xlu0 %v581, 48
      %v780 = vpop.permute.xlu0 %779
      %781 = vrot.lane.b32.xlu0 %v582, 48
      %v782 = vpop.permute.xlu0 %781
      %799 = vrot.lane.b32.xlu0 %v583, 56
      %v800 = vpop.permute.xlu0 %799
      %801 = vrot.lane.b32.xlu0 %v584, 56
      %v802 = vpop.permute.xlu0 %801
      %803 = vrot.lane.b32.xlu0 %v585, 56
      %v804 = vpop.permute.xlu0 %803
      %805 = vrot.lane.b32.xlu0 %v586, 56
      %v806 = vpop.permute.xlu0 %805
      %807 = vrot.lane.b32.xlu0 %v587, 56
      %v808 = vpop.permute.xlu0 %807
      %809 = vrot.lane.b32.xlu0 %v588, 56
      %v810 = vpop.permute.xlu0 %809
      %811 = vrot.lane.b32.xlu0 %v589, 56
      %v812 = vpop.permute.xlu0 %811
      %813 = vrot.lane.b32.xlu0 %v590, 56
      %v814 = vpop.permute.xlu0 %813
      %831 = vrot.lane.b32.xlu0 %v591, 64
      %v832 = vpop.permute.xlu0 %831
      %833 = vrot.lane.b32.xlu0 %v592, 64
      %v834 = vpop.permute.xlu0 %833
      %835 = vrot.lane.b32.xlu0 %v593, 64
      %v836 = vpop.permute.xlu0 %835
      %837 = vrot.lane.b32.xlu0 %v594, 64
      %v838 = vpop.permute.xlu0 %837
      %839 = vrot.lane.b32.xlu0 %v595, 64
      %v840 = vpop.permute.xlu0 %839
      %841 = vrot.lane.b32.xlu0 %v596, 64
      %v842 = vpop.permute.xlu0 %841
      %843 = vrot.lane.b32.xlu0 %v597, 64
      %v844 = vpop.permute.xlu0 %843
      %845 = vrot.lane.b32.xlu0 %v598, 64
      %v846 = vpop.permute.xlu0 %845
      %v855 = vsel %vm495, %v526, %v608
      %v856 = vsel %vm495, %v527, %v610
      %v857 = vsel %vm495, %v528, %v612
      %v858 = vsel %vm495, %v529, %v614
      %v859 = vsel %vm495, %v530, %v616
      %v860 = vsel %vm495, %v531, %v618
      %v861 = vsel %vm495, %v532, %v620
      %v862 = vsel %vm495, %v533, %v622
      %vm863 = vcmask 130048
      %v864 = vsel %vm863, %v855, %v640
      %v865 = vsel %vm863, %v856, %v642
      %v866 = vsel %vm863, %v857, %v644
      %v867 = vsel %vm863, %v858, %v646
      %v868 = vsel %vm863, %v859, %v648
      %v869 = vsel %vm863, %v860, %v650
      %v870 = vsel %vm863, %v861, %v652
      %v871 = vsel %vm863, %v862, %v654
      %vm872 = vcmask 195584
      %v873 = vsel %vm872, %v864, %v672
      %v874 = vsel %vm872, %v865, %v674
      %v875 = vsel %vm872, %v866, %v676
      %v876 = vsel %vm872, %v867, %v678
      %v877 = vsel %vm872, %v868, %v680
      %v878 = vsel %vm872, %v869, %v682
      %v879 = vsel %vm872, %v870, %v684
      %v880 = vsel %vm872, %v871, %v686
      %vm881 = vcmask 261120
      %v882 = vsel %vm881, %v873, %v704
      %v883 = vsel %vm881, %v874, %v706
      %v884 = vsel %vm881, %v875, %v708
      %v885 = vsel %vm881, %v876, %v710
      %v886 = vsel %vm881, %v877, %v712
      %v887 = vsel %vm881, %v878, %v714
      %v888 = vsel %vm881, %v879, %v716
      %v889 = vsel %vm881, %v880, %v718
      %vm890 = vcmask 326656
      %v891 = vsel %vm890, %v882, %v736
      %v892 = vsel %vm890, %v883, %v738
      %v893 = vsel %vm890, %v884, %v740
      %v894 = vsel %vm890, %v885, %v742
      %v895 = vsel %vm890, %v886, %v744
      %v896 = vsel %vm890, %v887, %v746
      %v897 = vsel %vm890, %v888, %v748
      %v898 = vsel %vm890, %v889, %v750
      %vm899 = vcmask 392192
      %v900 = vsel %vm899, %v891, %v768
      %v901 = vsel %vm899, %v892, %v770
      %v902 = vsel %vm899, %v893, %v772
      %v903 = vsel %vm899, %v894, %v774
      %v904 = vsel %vm899, %v895, %v776
      %v905 = vsel %vm899, %v896, %v778
      %v906 = vsel %vm899, %v897, %v780
      %v907 = vsel %vm899, %v898, %v782
      %vm908 = vcmask 457728
      %v909 = vsel %vm908, %v900, %v800
      %v910 = vsel %vm908, %v901, %v802
      %v911 = vsel %vm908, %v902, %v804
      %v912 = vsel %vm908, %v903, %v806
      %v913 = vsel %vm908, %v904, %v808
      %v914 = vsel %vm908, %v905, %v810
      %v915 = vsel %vm908, %v906, %v812
      %v916 = vsel %vm908, %v907, %v814
      %vm917 = vcmask 523264
      %v918 = vsel %vm917, %v909, %v832
      %v919 = vsel %vm917, %v910, %v834
      %v920 = vsel %vm917, %v911, %v836
      %v921 = vsel %vm917, %v912, %v838
      %v922 = vsel %vm917, %v913, %v840
      %v923 = vsel %vm917, %v914, %v842
      %v924 = vsel %vm917, %v915, %v844
      %v925 = vsel %vm917, %v916, %v846
      %v926 = vpack.c.bf16 %v919, %v918
      %v927 = vpack.c.bf16 %v921, %v920
      %v928 = vpack.c.bf16 %v923, %v922
      %v929 = vpack.c.bf16 %v925, %v924
      %v930 = vld [vmem:[%s4] sm:$0xf]
      %v931 = vld [vmem:[%s4 + $0x4] sm:$0xf]
      %v932 = vld [vmem:[%s4 + $0x8] sm:$0xf]
      %v933 = vld [vmem:[%s4 + $0xc] sm:$0xf]
      %v934 = vld [vmem:[%s4 + $0x10] sm:$0xf]
      %v935 = vld [vmem:[%s4 + $0x14] sm:$0xf]
      %v936 = vld [vmem:[%s4 + $0x18] sm:$0xf]
      %v937 = vld [vmem:[%s4 + $0x1c] sm:$0xf]
      %v938 = vld [vmem:[%s4 + $0x20] sm:$0xf]
      %v948 = vunpack.c.l.b16 %v930
      %v949 = vunpack.c.l.b16 %v931
      %v950 = vunpack.c.l.b16 %v932
      %v951 = vunpack.c.l.b16 %v933
      %v952 = vunpack.c.l.b16 %v934
      %v953 = vunpack.c.l.b16 %v935
      %v954 = vunpack.c.l.b16 %v936
      %v955 = vunpack.c.l.b16 %v937
      %v956 = vunpack.c.l.b16 %v938
      %v957 = vpack.c.b16 %v949, %v948
      %v958 = vpack.c.b16 %v951, %v950
      %v959 = vpack.c.b16 %v953, %v952
      %v960 = vpack.c.b16 %v955, %v954
      %v961 = vpack.c.b16 %v956, %v956
      %vm966 = vcmask 588800
      %v968 = vsel %vm966, %v926, 0
      %v971 = vsel %vm966, %v927, 0
      %v974 = vsel %vm966, %v928, 0
      %v977 = vsel %vm966, %v929, 0
      %vm979 = vcmask 1043456
      %v981 = vsel %vm979, %v961, 0
      %983 = vmatprep.subr.bf16.mxu0 0
      %984 = vmatpush1.bf16.msra.mxu0 0
      %985 = vmatprep.subr.bf16.mxu0 0
      %986 = vmatpush1.bf16.msra.mxu0 0
      %987 = vmatprep.subr.bf16.mxu0 0
      %988 = vmatpush1.bf16.msra.mxu0 0
      %989 = vmatprep.subr.bf16.mxu0 0
      %990 = vmatpush1.bf16.msra.mxu0 %v981
      %991 = vmatprep.subr.bf16.mxu0 0
      %992 = vmatpush1.bf16.msra.mxu0 %v960
      %993 = vmatprep.subr.bf16.mxu0 0
      %994 = vmatpush1.bf16.msra.mxu0 %v959
      %995 = vmatprep.subr.bf16.mxu0 0
      %996 = vmatpush1.bf16.msra.mxu0 %v958
      %997 = vmatprep.subr.bf16.mxu0 0
      %998 = vmatpush1.bf16.msra.mxu0 %v957
      %999 = vmatprep.subr.bf16.mxu0 0
      %1000 = vmatpush2.bf16.msra.mxu0 0
      %1001 = vmatprep.subr.bf16.mxu0 0
      %1002 = vmatpush2.bf16.msra.mxu0 0
      %1003 = vmatprep.subr.bf16.mxu0 0
      %1004 = vmatpush2.bf16.msra.mxu0 0
      %1005 = vmatprep.subr.bf16.mxu0 0
      %1006 = vmatpush2.bf16.msra.mxu0 0
      %1007 = vmatprep.subr.bf16.mxu0 0
      %1008 = vmatpush2.bf16.msra.mxu0 0
      %1009 = vmatprep.subr.bf16.mxu0 0
      %1010 = vmatpush2.bf16.msra.mxu0 0
      %1011 = vmatprep.subr.bf16.mxu0 0
      %1012 = vmatpush2.bf16.msra.mxu0 0
      %1013 = vmatprep.subr.bf16.mxu0 0
      %1014 = vmatpush2.bf16.msra.mxu0 0
      %1015 = vmatprep.mubr.bf16.mxu0 0
      %1016 = vmatmul.mubr.bf16.gmra.mxu0 %v968
      %v1017 = vpop.f32.mrf.mxu0
      %v1018 = vadd.f32 0.0, %v1017
      %v1019 = vpop.f32.mrf.mxu0
      %v1020 = vpop.f32.mrf.mxu0
      %v1021 = vadd.f32 0.0, %v1020
      %v1022 = vpop.f32.mrf.mxu0
      %1023 = vmatprep.mubr.bf16.mxu0 0
      %1024 = vmatmul.mubr.bf16.gmra.mxu0 %v971
      %v1025 = vpop.f32.mrf.mxu0
      %v1026 = vadd.f32 0.0, %v1025
      %v1027 = vpop.f32.mrf.mxu0
      %v1028 = vpop.f32.mrf.mxu0
      %v1029 = vadd.f32 0.0, %v1028
      %v1030 = vpop.f32.mrf.mxu0
      %1031 = vmatprep.mubr.bf16.mxu0 0
      %1032 = vmatmul.mubr.bf16.gmra.mxu0 %v974
      %v1033 = vpop.f32.mrf.mxu0
      %v1034 = vadd.f32 0.0, %v1033
      %v1035 = vpop.f32.mrf.mxu0
      %v1036 = vpop.f32.mrf.mxu0
      %v1037 = vadd.f32 0.0, %v1036
      %v1038 = vpop.f32.mrf.mxu0
      %1039 = vmatprep.mubr.bf16.mxu0 0
      %1040 = vmatmul.mubr.bf16.gmra.mxu0 %v977
      %v1041 = vpop.f32.mrf.mxu0
      %v1042 = vadd.f32 0.0, %v1041
      %v1043 = vpop.f32.mrf.mxu0
      %v1044 = vpop.f32.mrf.mxu0
      %v1045 = vadd.f32 0.0, %v1044
      %v1046 = vpop.f32.mrf.mxu0
      %1047 = vdwg.mxu0
      %v1048 = vadd.f32 %v465, %v1018
      %v1049 = vadd.f32 %v468, %v1021
      %v1050 = vadd.f32 %v473, %v1026
      %v1051 = vadd.f32 %v476, %v1029
      %v1052 = vadd.f32 %v481, %v1034
      %v1053 = vadd.f32 %v484, %v1037
      %v1054 = vadd.f32 %v489, %v1042
      %v1055 = vadd.f32 %v492, %v1045
      %v1056 = vmax.f32 %v1048, 0.0
      %v1057 = vmax.f32 %v1049, 0.0
      %v1058 = vmax.f32 %v1050, 0.0
      %v1059 = vmax.f32 %v1051, 0.0
      %v1060 = vmax.f32 %v1052, 0.0
      %v1061 = vmax.f32 %v1053, 0.0
      %v1062 = vmax.f32 %v1054, 0.0
      %v1063 = vmax.f32 %v1055, 0.0
      %1064 = vst.msk [vmem:[%s251] sm:$0xff] %vm495, %v1056
      %1065 = vst.msk [vmem:[%s251 + $0x8] sm:$0xff] %vm495, %v1057
      %1066 = vst.msk [vmem:[%s251 + $0x10] sm:$0xff] %vm495, %v1058
      %1067 = vst.msk [vmem:[%s251 + $0x18] sm:$0xff] %vm495, %v1059
      %1068 = vst.msk [vmem:[%s251 + $0x20] sm:$0xff] %vm495, %v1060
      %1069 = vst.msk [vmem:[%s251 + $0x28] sm:$0xff] %vm495, %v1061
      %1070 = vst.msk [vmem:[%s251 + $0x30] sm:$0xff] %vm495, %v1062
      %1071 = vst.msk [vmem:[%s251 + $0x38] sm:$0xff] %vm495, %v1063
      %p1072 = scmp.lt.s32.totalorder %s17, 1
      %s1073 = scalar_select %p1072, %s17, 1
      %s1074 = smul.addr %s1073, 8
      %s1075 = smul.addr %s1074, 8
      %s1076 = scalar_lea.vmem %s6, %s1075
      // Predicated region
      $region45: #{resnet_block_forward.1} parent=43 // pred_check
        %p1077 = pneg %p166
      $region46: #{resnet_block_forward.1} parent=43 // pred_check_branch
        %1079 = sbr.rel (%p1077) target = $region48
      $region47: #{resnet_block_forward.1} parent=43 // pred_region
        _
      $region48: #{resnet_block_forward.1} parent=43 // pred_fallthru
        _
    $region44: #{resnet_block_forward.1} parent=5 // pred_fallthru
      _
    %p1080 = scmp.le.s32.totalorder 2, %s12
    // Predicated region
    $region49: #{resnet_block_forward.1} parent=5 // pred_check
      %p1081 = pneg %p1080
    $region50: #{resnet_block_forward.1} parent=5 // pred_check_branch
      %1083 = sbr.rel (%p1081) target = $region52
    $region51: #{resnet_block_forward.1} parent=5 // pred_region
      %s1084 = ssub.s32 %s12, 2
      // Predicated region
      $region53: #{resnet_block_forward.1} parent=51 // pred_check
        %p1085 = pneg %p172
      $region54: #{resnet_block_forward.1} parent=51 // pred_check_branch
        %1087 = sbr.rel (%p1085) target = $region56
      $region55: #{resnet_block_forward.1} parent=51 // pred_region
        %p1088 = scmp.lt.s32.totalorder %s18, 1
        %s1089 = scalar_select %p1088, %s18, 1
        %s1090 = smul.addr %s1089, 8
        %s1091 = smul.addr %s1090, 8
        %s1092 = scalar_lea.vmem %s6, %s1091
      $region56: #{resnet_block_forward.1} parent=51 // pred_fallthru
        _
    $region52: #{resnet_block_forward.1} parent=5 // pred_fallthru
      _
  $region6: #{resnet_block_forward.1} parent=0 // loop_footer
    %s16 = sadd.s32 1, %s12
  $region7: #{resnet_block_forward.1} parent=0 // loop_footer_branch
    %11 = sbr.rel target = $region3
  $region8: #{resnet_block_forward.1} parent=0 // loop_exit
    _

</llo_original>
